<compile_context>
chip_gen: v5e
topology: v5e:2x2
jax: 0.10.0
libtpu: 0.0.40
codegen_flags: <defaults>
</compile_context>

<pallas_src>
import functools

import jax
import jax.numpy as jnp
from jax.experimental import pallas as pl
from jax.experimental.pallas import tpu as pltpu


def value_mlp_kernel(x_ref, w1_ref, b1_ref, w2_ref, b2_ref, w3_ref, b3_ref, o_ref):
    # x_ref: (1, TILE) f32, elements on lanes.  Weights use torch (out, in) layout,
    # biases are (out, 1) so everything broadcasts along lanes.
    x = x_ref[...]                                              # (1, TILE)

    # Layer 0: Linear(1, H1) + ReLU  -> sublane-broadcast FMA on the VPU (f32).
    h = jnp.maximum(w1_ref[...] * x + b1_ref[...], 0.0)        # (H1, TILE)

    # Layer 1: Linear(H1, H2) + ReLU -> (H2, H1) @ (H1, TILE) on the MXU.
    # Operands are cast to the (possibly bf16) weight dtype; accumulation stays f32.
    h = jnp.dot(w2_ref[...], h.astype(w2_ref.dtype),
                preferred_element_type=jnp.float32) + b2_ref[...]
    h = jnp.maximum(h, 0.0)                                     # (H2, TILE)

    # Layer 2 (last): Linear(H2, 1), no activation.  M=1 matmul would waste the MXU;
    # do a VPU multiply + cross-sublane (XLU) reduction instead.
    o_ref[...] = jnp.sum(w3_ref[...] * h, axis=0, keepdims=True) + b3_ref[...]  # (1, TILE)


@functools.lru_cache(maxsize=1)
def _num_tensorcores():
    # TensorCores per device (2 on megacore/v7x-style chips).  Falls back to 1 if the
    # attribute is unavailable, which is always a safe (conservative) choice.
    try:
        return max(1, int(getattr(jax.devices()[0], "num_cores", 1) or 1))
    except Exception:  # pragma: no cover
        return 1


def _pick_tile(n, tile_l, num_cores):
    # Lane tile must be a multiple of 128 and no larger than tile_l.
    n128 = -(-n // 128) * 128
    if num_cores <= 1 and n128 <= tile_l:
        # Single-TC chip (v5e/v6e): splitting a small input only adds per-step overhead.
        return n128
    # Target >= 2 grid steps per TensorCore so each core keeps DMA/compute overlap
    # while the "parallel" grid axis shards across cores.
    steps = max(2 * num_cores, -(-n128 // tile_l))
    per_step = -(-n128 // steps)
    tile = -(-per_step // 128) * 128
    return max(128, min(tile, tile_l))


@functools.partial(jax.jit, static_argnames=("tile_l", "matmul_bf16"))
def value_layer_forward(x, params, *, tile_l=32768, matmul_bf16=True):
    """Equivalent of ValueLayer.forward(x): x[None, ..., None] -> MLP -> squeeze().

    tile_l: max lanes per grid step.  Default 32768 fits v7x's 64 MiB VMEM; on
    v5e/v6e (128 MiB physical) it can be raised to ~98304-131072 for slightly
    fewer, fatter steps (vmem_limit_bytes is budgeted automatically).
    """
    w1, b1, w2, b2, w3, b3 = params
    h1 = w1.shape[0]
    h2 = w2.shape[0]

    orig_shape = x.shape
    xf = x.reshape(1, -1).astype(jnp.float32)        # elements along lanes
    n = xf.shape[1]
    tile = _pick_tile(n, tile_l, _num_tensorcores())
    pad = (-n) % tile
    if pad:
        xf = jnp.pad(xf, ((0, 0), (0, pad)))
    n_padded = xf.shape[1]
    grid = (n_padded // tile,)

    # bf16 operands for the MXU matmul (f32 accumulate); keep an f32 path for validation.
    w2_mm = w2.astype(jnp.bfloat16) if matmul_bf16 else w2.astype(jnp.float32)
    # Last layer weight as a (H2, 1) column for the VPU-multiply + sublane-reduce path.
    w3_col = w3.reshape(h2, 1).astype(jnp.float32)

    flops = 2 * n_padded * (h1 + h1 * h2 + h2)
    bytes_accessed = 4 * (2 * n_padded + 2 * h1 + h1 * h2 + 2 * h2 + h2 + 1)

    # VMEM budget: (1,tile) x/o blocks physically pad to (8,tile) f32 and are
    # double-buffered (2 arrays * 2 buffers * 8 rows); the two (H,tile) f32
    # intermediates live once each; weights are negligible.  +1 MiB slack.
    vmem_bytes = 4 * tile * (2 * 2 * 8 + h1 + h2) + (1 << 20)
    vmem_limit = int(min(max(vmem_bytes, 32 << 20), 100 << 20))

    out = pl.pallas_call(
        value_mlp_kernel,
        out_shape=jax.ShapeDtypeStruct((1, n_padded), jnp.float32),
        grid=grid,
        in_specs=[
            pl.BlockSpec((1, tile), lambda i: (0, i)),   # x tile (lane-dense)
            pl.BlockSpec((h1, 1), lambda i: (0, 0)),     # W1  (H1, 1)
            pl.BlockSpec((h1, 1), lambda i: (0, 0)),     # b1  (H1, 1)
            pl.BlockSpec((h2, h1), lambda i: (0, 0)),    # W2  (H2, H1), bf16 or f32
            pl.BlockSpec((h2, 1), lambda i: (0, 0)),     # b2  (H2, 1)
            pl.BlockSpec((h2, 1), lambda i: (0, 0)),     # W3  (H2, 1) column
            pl.BlockSpec((1, 1), lambda i: (0, 0)),      # b3  (1, 1)
        ],
        out_specs=pl.BlockSpec((1, tile), lambda i: (0, i)),
        compiler_params=pltpu.CompilerParams(
            dimension_semantics=("parallel",),
            vmem_limit_bytes=vmem_limit),
        cost_estimate=pl.CostEstimate(
            flops=flops, transcendentals=0, bytes_accessed=bytes_accessed),
    )(xf, w1, b1, w2_mm, b2, w3_col, b3)

    out = out[0, :n].reshape(orig_shape)
    # torch .squeeze(): drop all size-1 dims (the added leading/trailing ones and
    # any size-1 dims of the original input), matching PyTorch semantics.
    return jnp.squeeze(out)


def init_params(key, mlp_layers=(1, 32, 32, 1)):
    """Deterministic synthetic weights with the module's shapes (torch (out, in) layout)."""
    assert mlp_layers[0] == 1 and mlp_layers[-1] == 1
    # TODO(synk): the trilinear-fit training loop (init_kernel) and trilinear_init.pth
    # loading are offline parameter initialization, not part of the forward hot path,
    # so they are not reproduced.
    keys = jax.random.split(key, 2 * (len(mlp_layers) - 1))
    params = []
    in_c = mlp_layers[0]
    for li, out_c in enumerate(mlp_layers[1:]):
        kw, kb = keys[2 * li], keys[2 * li + 1]
        # weight: (out, in); bias stored as (out, 1) for lane-broadcast in the kernel
        w = (jax.random.normal(kw, (out_c, in_c), jnp.float32)
             / jnp.sqrt(jnp.float32(in_c)))
        b = 0.1 * jax.random.normal(kb, (out_c, 1), jnp.float32)
        params += [w, b]
        in_c = out_c
    return tuple(params)


def value_layer_ref(x, params):
    """Pure-JAX reference of ValueLayer.forward."""
    w1, b1, w2, b2, w3, b3 = params
    h = x.reshape(-1, 1).astype(jnp.float32)
    h = jnp.maximum(h @ w1.T + b1.T, 0.0)
    h = jnp.maximum(h @ w2.T + b2.T, 0.0)
    o = h @ w3.T + b3.T
    return jnp.squeeze(o.reshape(x.shape))


if __name__ == "__main__":
    key = jax.random.PRNGKey(0)
    k_param, k_x, k_x2 = jax.random.split(key, 3)

    params = init_params(k_param, mlp_layers=(1, 32, 32, 1))

    # x: 1-D tensor of normalized event timestamps in [-1, 1], as the module uses.
    N = 1024
    x = jax.random.uniform(k_x, (N,), jnp.float32, minval=-1.0, maxval=1.0)
    ref = value_layer_ref(x, params)

    # 1) exact-structure check: f32 matmul path, tight tolerance.
    out_f32 = jax.block_until_ready(value_layer_forward(x, params, matmul_bf16=False))
    assert out_f32.shape == ref.shape == (N,)
    assert jnp.allclose(out_f32, ref, atol=1e-5, rtol=1e-5), "f32 path mismatch vs reference"

    # 2) default fast path: bf16 MXU operands, f32 accumulation -> looser tolerance.
    out_bf16 = jax.block_until_ready(value_layer_forward(x, params))
    assert out_bf16.shape == (N,)
    assert jnp.allclose(out_bf16, ref, atol=5e-2, rtol=5e-2), "bf16 path mismatch vs reference"

    # 3) non-multiple-of-128 / 2-D input exercising padding + squeeze semantics.
    x2 = jax.random.uniform(k_x2, (1, 777), jnp.float32, minval=-1.0, maxval=1.0)
    out2 = jax.block_until_ready(value_layer_forward(x2, params))
    ref2 = value_layer_ref(x2, params)
    assert out2.shape == ref2.shape == (777,)
    assert jnp.allclose(out2, ref2, atol=5e-2, rtol=5e-2), "padded-input mismatch vs reference"

    print("KERNEL_OK")
</pallas_src>

<mosaic_0001>
module attributes {stable_mosaic.version = 11 : i64} {
  func.func @value_mlp_kernel(%arg0: i32, %arg1: memref<1x1024xf32, #tpu.memory_space<vmem>>, %arg2: memref<32x1xf32, #tpu.memory_space<vmem>>, %arg3: memref<32x1xf32, #tpu.memory_space<vmem>>, %arg4: memref<32x32xf32, #tpu.memory_space<vmem>>, %arg5: memref<32x1xf32, #tpu.memory_space<vmem>>, %arg6: memref<32x1xf32, #tpu.memory_space<vmem>>, %arg7: memref<1x1xf32, #tpu.memory_space<vmem>>, %arg8: memref<1x1024xf32, #tpu.memory_space<vmem>>) attributes {dimension_semantics = [#tpu.dimension_semantics<parallel>], iteration_bounds = array<i64: 1>, scalar_prefetch = 0 : i64, scratch_operands = 0 : i64, tpu.core_type = #tpu.core_type<tc>, window_params = [{transform_indices = @transform_0, window_bounds = array<i64: 1, 1024>}, {pipeline_mode = #tpu.pipeline_mode<synchronous>, transform_indices = @transform_1, window_bounds = array<i64: 32, 1>}, {pipeline_mode = #tpu.pipeline_mode<synchronous>, transform_indices = @transform_2, window_bounds = array<i64: 32, 1>}, {pipeline_mode = #tpu.pipeline_mode<synchronous>, transform_indices = @transform_3, window_bounds = array<i64: 32, 32>}, {pipeline_mode = #tpu.pipeline_mode<synchronous>, transform_indices = @transform_4, window_bounds = array<i64: 32, 1>}, {pipeline_mode = #tpu.pipeline_mode<synchronous>, transform_indices = @transform_5, window_bounds = array<i64: 32, 1>}, {pipeline_mode = #tpu.pipeline_mode<synchronous>, transform_indices = @transform_6, window_bounds = array<i64: 1, 1>}, {transform_indices = @transform_7, window_bounds = array<i64: 1, 1024>}]} {
    %c0 = arith.constant 0 : index
    %c0_0 = arith.constant 0 : index
    %0 = vector.load %arg1[%c0, %c0_0] : memref<1x1024xf32, #tpu.memory_space<vmem>>, vector<1x1024xf32>
    %c0_1 = arith.constant 0 : index
    %c0_2 = arith.constant 0 : index
    %1 = vector.load %arg2[%c0_1, %c0_2] : memref<32x1xf32, #tpu.memory_space<vmem>>, vector<32x1xf32>
    %2 = vector.broadcast %1 : vector<32x1xf32> to vector<32x1024xf32>
    %3 = vector.broadcast %0 : vector<1x1024xf32> to vector<32x1024xf32>
    %4 = arith.mulf %2, %3 : vector<32x1024xf32>
    %c0_3 = arith.constant 0 : index
    %c0_4 = arith.constant 0 : index
    %5 = vector.load %arg3[%c0_3, %c0_4] : memref<32x1xf32, #tpu.memory_space<vmem>>, vector<32x1xf32>
    %6 = vector.broadcast %5 : vector<32x1xf32> to vector<32x1024xf32>
    %7 = arith.addf %4, %6 : vector<32x1024xf32>
    %cst = arith.constant 0.000000e+00 : f32
    %8 = vector.broadcast %cst : f32 to vector<32x1024xf32>
    %9 = arith.maximumf %7, %8 : vector<32x1024xf32>
    %c0_5 = arith.constant 0 : index
    %c0_6 = arith.constant 0 : index
    %10 = vector.load %arg4[%c0_5, %c0_6] : memref<32x32xf32, #tpu.memory_space<vmem>>, vector<32x32xf32>
    %cst_7 = arith.constant dense<0.000000e+00> : vector<32x1024xf32>
    %11 = tpu.matmul %10, %9, %cst_7 {dimension_numbers = #tpu.dot_dimension_numbers<[1], [0], [0], [1], [0, 0, 1, 1], [], []>} : vector<32x32xf32>, vector<32x1024xf32>, vector<32x1024xf32> -> vector<32x1024xf32>
    %c0_8 = arith.constant 0 : index
    %c0_9 = arith.constant 0 : index
    %12 = vector.load %arg5[%c0_8, %c0_9] : memref<32x1xf32, #tpu.memory_space<vmem>>, vector<32x1xf32>
    %13 = vector.broadcast %12 : vector<32x1xf32> to vector<32x1024xf32>
    %14 = arith.addf %11, %13 : vector<32x1024xf32>
    %cst_10 = arith.constant 0.000000e+00 : f32
    %15 = vector.broadcast %cst_10 : f32 to vector<32x1024xf32>
    %16 = arith.maximumf %14, %15 : vector<32x1024xf32>
    %c0_11 = arith.constant 0 : index
    %c0_12 = arith.constant 0 : index
    %17 = vector.load %arg6[%c0_11, %c0_12] : memref<32x1xf32, #tpu.memory_space<vmem>>, vector<32x1xf32>
    %18 = vector.broadcast %17 : vector<32x1xf32> to vector<32x1024xf32>
    %19 = arith.mulf %18, %16 : vector<32x1024xf32>
    %cst_13 = arith.constant dense<0.000000e+00> : vector<1024xf32>
    %20 = vector.multi_reduction <add>, %19, %cst_13 [0] : vector<32x1024xf32> to vector<1024xf32>
    %21 = vector.shape_cast %20 : vector<1024xf32> to vector<1x1024xf32>
    %c0_14 = arith.constant 0 : index
    %c0_15 = arith.constant 0 : index
    %22 = vector.load %arg7[%c0_14, %c0_15] : memref<1x1xf32, #tpu.memory_space<vmem>>, vector<1x1xf32>
    %23 = vector.broadcast %22 : vector<1x1xf32> to vector<1x1024xf32>
    %24 = arith.addf %21, %23 : vector<1x1024xf32>
    %c0_16 = arith.constant 0 : index
    %c0_17 = arith.constant 0 : index
    %25 = vector.load %arg8[%c0_16, %c0_17] : memref<1x1024xf32, #tpu.memory_space<vmem>>, vector<1x1024xf32>
    tpu.vector_store %arg8[%c0_16, %c0_17], %24 {strides = array<i32>} : memref<1x1024xf32, #tpu.memory_space<vmem>>, vector<1x1024xf32>,
    return
  }
  func.func @transform_0(%arg0: i32) -> (i32, i32) {
    %c0_i32 = arith.constant 0 : i32
    %c0_i32_0 = arith.constant 0 : i32
    return %c0_i32, %arg0 : i32, i32
  }
  func.func @transform_1(%arg0: i32) -> (i32, i32) {
    %c0_i32 = arith.constant 0 : i32
    %c0_i32_0 = arith.constant 0 : i32
    %c0_i32_1 = arith.constant 0 : i32
    return %c0_i32, %c0_i32_0 : i32, i32
  }
  func.func @transform_2(%arg0: i32) -> (i32, i32) {
    %c0_i32 = arith.constant 0 : i32
    %c0_i32_0 = arith.constant 0 : i32
    %c0_i32_1 = arith.constant 0 : i32
    return %c0_i32, %c0_i32_0 : i32, i32
  }
  func.func @transform_3(%arg0: i32) -> (i32, i32) {
    %c0_i32 = arith.constant 0 : i32
    %c0_i32_0 = arith.constant 0 : i32
    %c0_i32_1 = arith.constant 0 : i32
    return %c0_i32, %c0_i32_0 : i32, i32
  }
  func.func @transform_4(%arg0: i32) -> (i32, i32) {
    %c0_i32 = arith.constant 0 : i32
    %c0_i32_0 = arith.constant 0 : i32
    %c0_i32_1 = arith.constant 0 : i32
    return %c0_i32, %c0_i32_0 : i32, i32
  }
  func.func @transform_5(%arg0: i32) -> (i32, i32) {
    %c0_i32 = arith.constant 0 : i32
    %c0_i32_0 = arith.constant 0 : i32
    %c0_i32_1 = arith.constant 0 : i32
    return %c0_i32, %c0_i32_0 : i32, i32
  }
  func.func @transform_6(%arg0: i32) -> (i32, i32) {
    %c0_i32 = arith.constant 0 : i32
    %c0_i32_0 = arith.constant 0 : i32
    %c0_i32_1 = arith.constant 0 : i32
    return %c0_i32, %c0_i32_0 : i32, i32
  }
  func.func @transform_7(%arg0: i32) -> (i32, i32) {
    %c0_i32 = arith.constant 0 : i32
    %c0_i32_0 = arith.constant 0 : i32
    return %c0_i32, %arg0 : i32, i32
  }
}

</mosaic_0001>

<llo_original>
// kernel: value_layer_forward.1
$region0: #{value_layer_forward.1}
  #allocation0 [shape = 'u32[]', space=smem, size = 0x4, offset = 0x4, fixed_abs, tag = 'smem constant byte address 0x4 - core index']
  #allocation1 [shape = 'u32[72,128]{1,0:T(1,128)}', space=vmem, size = 0x9000, scoped, tag = 'internal scratch']
  #allocation2 [shape = 'f32[1,1]{1,0:T(1,128)S(1)}', space=vmem, size = 0x200, scoped, tag = 'scoped memory for value_layer_forward.1']
  %s0 = inlined_call_operand.vmem [shape: f32[1,1024], index: 0, kind: input, shape index: {}]
  %s1 = inlined_call_operand.vmem [shape: f32[32,1], index: 1, kind: input, shape index: {}]
  %s2 = inlined_call_operand.vmem [shape: f32[32,1], index: 2, kind: input, shape index: {}]
  %s3 = inlined_call_operand.vmem [shape: f32[32,32], index: 3, kind: input, shape index: {}]
  %s4 = inlined_call_operand.vmem [shape: f32[32,1], index: 4, kind: input, shape index: {}]
  %s5 = inlined_call_operand.vmem [shape: f32[32,1], index: 5, kind: input, shape index: {}]
  %s6 = inlined_call_operand.<no memory space> [shape: f32[1,1], index: 6, kind: input, shape index: {}]
  %s7 = inlined_call_operand.hbm [shape: f32[1,1024], index: 7, kind: output, shape index: {}]
  %s8 = sld [smem:[#allocation0]]
  $region38: #{value_layer_forward.1} parent=0
    _
  %s10 = ssub.s32 1, %s8
  %s11 = scalar_select 0, %s10, %s8
  %v12 = vstv %s6
  %13 = vst [vmem:[#allocation2] sm:$0x1] %v12
  $region1: #{value_layer_forward.1} parent=0
    #allocation3 [shape = 'u8[4096]{0}', space=vmem, size = 0x1000, scoped, tag = 'output window, operand 0, single buffered']
    #allocation4 [shape = 's32[1]{0}', space=sflag, size = 0x4, scoped, tag = 'scoped memory for value_layer_forward.1']
    %14 = vsyncpa [#allocation4], 0
    // Predicated region
    $region2: #{value_layer_forward.1} parent=1 // pred_check
      _
    $region3: #{value_layer_forward.1} parent=1 // pred_check_branch
      %16 = sbr.rel (0) target = $region5
    $region4: #{value_layer_forward.1} parent=1 // pred_region
      _
    $region5: #{value_layer_forward.1} parent=1 // pred_fallthru
      _
    // Predicated region
    $region6: #{value_layer_forward.1} parent=1 // pred_check
      _
    $region7: #{value_layer_forward.1} parent=1 // pred_check_branch
      %18 = sbr.rel (0) target = $region9
    $region8: #{value_layer_forward.1} parent=1 // pred_region
      _
    $region9: #{value_layer_forward.1} parent=1 // pred_fallthru
      _
    // Predicated region
    $region10: #{value_layer_forward.1} parent=1 // pred_check
      _
    $region11: #{value_layer_forward.1} parent=1 // pred_check_branch
      %20 = sbr.rel (0) target = $region13
    $region12: #{value_layer_forward.1} parent=1 // pred_region
      _
    $region13: #{value_layer_forward.1} parent=1 // pred_fallthru
      _
    // Predicated region
    $region14: #{value_layer_forward.1} parent=1 // pred_check
      _
    $region15: #{value_layer_forward.1} parent=1 // pred_check_branch
      %22 = sbr.rel (0) target = $region17
    $region16: #{value_layer_forward.1} parent=1 // pred_region
      _
    $region17: #{value_layer_forward.1} parent=1 // pred_fallthru
      _
    // Predicated region
    $region18: #{value_layer_forward.1} parent=1 // pred_check
      _
    $region19: #{value_layer_forward.1} parent=1 // pred_check_branch
      %24 = sbr.rel (0) target = $region21
    $region20: #{value_layer_forward.1} parent=1 // pred_region
      _
    $region21: #{value_layer_forward.1} parent=1 // pred_fallthru
      _
    // Predicated region
    $region22: #{value_layer_forward.1} parent=1 // pred_check
      _
    $region23: #{value_layer_forward.1} parent=1 // pred_check_branch
      %26 = sbr.rel (0) target = $region25
    $region24: #{value_layer_forward.1} parent=1 // pred_region
      _
    $region25: #{value_layer_forward.1} parent=1 // pred_fallthru
      _
    // Predicated region
    $region26: #{value_layer_forward.1} parent=1 // pred_check
      _
    $region27: #{value_layer_forward.1} parent=1 // pred_check_branch
      %28 = sbr.rel (0) target = $region29
    $region28: #{value_layer_forward.1} parent=1 // pred_region
      _
    $region29: #{value_layer_forward.1} parent=1 // pred_fallthru
      _
    %v29 = vld [vmem:[%s0] sm:$0xff]
    %v30 = vld [vmem:[%s1] sm:$0xff]
    %v31 = vld [vmem:[%s1 + $0x8] sm:$0xff]
    %v32 = vld [vmem:[%s1 + $0x10] sm:$0xff]
    %v33 = vld [vmem:[%s1 + $0x18] sm:$0xff]
    %35 = vset.pattern.permute.xlu0 0
    %36 = vperm.xlu0 %35, %v30
    %v37 = vpop.permute.xlu0 %36
    %40 = vset.pattern.permute.xlu0 0
    %41 = vperm.xlu0 %40, %v31
    %v42 = vpop.permute.xlu0 %41
    %45 = vset.pattern.permute.xlu0 0
    %46 = vperm.xlu0 %45, %v32
    %v47 = vpop.permute.xlu0 %46
    %50 = vset.pattern.permute.xlu0 0
    %51 = vperm.xlu0 %50, %v33
    %v52 = vpop.permute.xlu0 %51
    %v55 = vperm.slane %v29, 0
    %v56 = vperm.slane %v29, 1
    %v57 = vperm.slane %v29, 2
    %v58 = vperm.slane %v29, 3
    %v59 = vperm.slane %v29, 4
    %v60 = vperm.slane %v29, 5
    %v61 = vperm.slane %v29, 6
    %v62 = vperm.slane %v29, 7
    %v71 = vmul.f32 %v37, %v55
    %v72 = vmul.f32 %v37, %v56
    %v73 = vmul.f32 %v37, %v57
    %v74 = vmul.f32 %v37, %v58
    %v75 = vmul.f32 %v37, %v59
    %v76 = vmul.f32 %v37, %v60
    %v77 = vmul.f32 %v37, %v61
    %v78 = vmul.f32 %v37, %v62
    %v79 = vmul.f32 %v42, %v55
    %v80 = vmul.f32 %v42, %v56
    %v81 = vmul.f32 %v42, %v57
    %v82 = vmul.f32 %v42, %v58
    %v83 = vmul.f32 %v42, %v59
    %v84 = vmul.f32 %v42, %v60
    %v85 = vmul.f32 %v42, %v61
    %v86 = vmul.f32 %v42, %v62
    %v87 = vmul.f32 %v47, %v55
    %v88 = vmul.f32 %v47, %v56
    %v89 = vmul.f32 %v47, %v57
    %v90 = vmul.f32 %v47, %v58
    %v91 = vmul.f32 %v47, %v59
    %v92 = vmul.f32 %v47, %v60
    %v93 = vmul.f32 %v47, %v61
    %v94 = vmul.f32 %v47, %v62
    %v95 = vmul.f32 %v52, %v55
    %v96 = vmul.f32 %v52, %v56
    %v97 = vmul.f32 %v52, %v57
    %v98 = vmul.f32 %v52, %v58
    %v99 = vmul.f32 %v52, %v59
    %v100 = vmul.f32 %v52, %v60
    %v101 = vmul.f32 %v52, %v61
    %v102 = vmul.f32 %v52, %v62
    %v103 = vld [vmem:[%s2] sm:$0xff]
    %v104 = vld [vmem:[%s2 + $0x8] sm:$0xff]
    %v105 = vld [vmem:[%s2 + $0x10] sm:$0xff]
    %v106 = vld [vmem:[%s2 + $0x18] sm:$0xff]
    %108 = vset.pattern.permute.xlu0 0
    %109 = vperm.xlu0 %108, %v103
    %v110 = vpop.permute.xlu0 %109
    %113 = vset.pattern.permute.xlu0 0
    %114 = vperm.xlu0 %113, %v104
    %v115 = vpop.permute.xlu0 %114
    %118 = vset.pattern.permute.xlu0 0
    %119 = vperm.xlu0 %118, %v105
    %v120 = vpop.permute.xlu0 %119
    %123 = vset.pattern.permute.xlu0 0
    %124 = vperm.xlu0 %123, %v106
    %v125 = vpop.permute.xlu0 %124
    %v127 = vadd.f32 %v71, %v110
    %v128 = vadd.f32 %v72, %v110
    %v129 = vadd.f32 %v73, %v110
    %v130 = vadd.f32 %v74, %v110
    %v131 = vadd.f32 %v75, %v110
    %v132 = vadd.f32 %v76, %v110
    %v133 = vadd.f32 %v77, %v110
    %v134 = vadd.f32 %v78, %v110
    %v135 = vadd.f32 %v79, %v115
    %v136 = vadd.f32 %v80, %v115
    %v137 = vadd.f32 %v81, %v115
    %v138 = vadd.f32 %v82, %v115
    %v139 = vadd.f32 %v83, %v115
    %v140 = vadd.f32 %v84, %v115
    %v141 = vadd.f32 %v85, %v115
    %v142 = vadd.f32 %v86, %v115
    %v143 = vadd.f32 %v87, %v120
    %v144 = vadd.f32 %v88, %v120
    %v145 = vadd.f32 %v89, %v120
    %v146 = vadd.f32 %v90, %v120
    %v147 = vadd.f32 %v91, %v120
    %v148 = vadd.f32 %v92, %v120
    %v149 = vadd.f32 %v93, %v120
    %v150 = vadd.f32 %v94, %v120
    %v151 = vadd.f32 %v95, %v125
    %v152 = vadd.f32 %v96, %v125
    %v153 = vadd.f32 %v97, %v125
    %v154 = vadd.f32 %v98, %v125
    %v155 = vadd.f32 %v99, %v125
    %v156 = vadd.f32 %v100, %v125
    %v157 = vadd.f32 %v101, %v125
    %v158 = vadd.f32 %v102, %v125
    %v159 = vmax.f32 %v127, 0.0
    %v160 = vmax.f32 %v128, 0.0
    %v161 = vmax.f32 %v129, 0.0
    %v162 = vmax.f32 %v130, 0.0
    %v163 = vmax.f32 %v131, 0.0
    %v164 = vmax.f32 %v132, 0.0
    %v165 = vmax.f32 %v133, 0.0
    %v166 = vmax.f32 %v134, 0.0
    %v167 = vmax.f32 %v135, 0.0
    %v168 = vmax.f32 %v136, 0.0
    %v169 = vmax.f32 %v137, 0.0
    %v170 = vmax.f32 %v138, 0.0
    %v171 = vmax.f32 %v139, 0.0
    %v172 = vmax.f32 %v140, 0.0
    %v173 = vmax.f32 %v141, 0.0
    %v174 = vmax.f32 %v142, 0.0
    %v175 = vmax.f32 %v143, 0.0
    %v176 = vmax.f32 %v144, 0.0
    %v177 = vmax.f32 %v145, 0.0
    %v178 = vmax.f32 %v146, 0.0
    %v179 = vmax.f32 %v147, 0.0
    %v180 = vmax.f32 %v148, 0.0
    %v181 = vmax.f32 %v149, 0.0
    %v182 = vmax.f32 %v150, 0.0
    %v183 = vmax.f32 %v151, 0.0
    %v184 = vmax.f32 %v152, 0.0
    %v185 = vmax.f32 %v153, 0.0
    %v186 = vmax.f32 %v154, 0.0
    %v187 = vmax.f32 %v155, 0.0
    %v188 = vmax.f32 %v156, 0.0
    %v189 = vmax.f32 %v157, 0.0
    %v190 = vmax.f32 %v158, 0.0
    %v191 = vld [vmem:[%s3] sm:$0xff]
    %v192 = vld [vmem:[%s3 + $0x8] sm:$0xff]
    %v193 = vld [vmem:[%s3 + $0x10] sm:$0xff]
    %v194 = vld [vmem:[%s3 + $0x18] sm:$0xff]
    %v195 = vld [vmem:[%s4] sm:$0xff]
    %v196 = vld [vmem:[%s4 + $0x8] sm:$0xff]
    %v197 = vld [vmem:[%s4 + $0x10] sm:$0xff]
    %v198 = vld [vmem:[%s4 + $0x18] sm:$0xff]
    %200 = vset.pattern.permute.xlu0 0
    %201 = vperm.xlu0 %200, %v195
    %v202 = vpop.permute.xlu0 %201
    %205 = vset.pattern.permute.xlu0 0
    %206 = vperm.xlu0 %205, %v196
    %v207 = vpop.permute.xlu0 %206
    %210 = vset.pattern.permute.xlu0 0
    %211 = vperm.xlu0 %210, %v197
    %v212 = vpop.permute.xlu0 %211
    %215 = vset.pattern.permute.xlu0 0
    %216 = vperm.xlu0 %215, %v198
    %v217 = vpop.permute.xlu0 %216
    %vm219 = vcmask 261120
    %v221 = vsel %vm219, %v191, 0
    %v224 = vsel %vm219, %v192, 0
    %v227 = vsel %vm219, %v193, 0
    %v230 = vsel %vm219, %v194, 0
    %232 = vmatpush.msra.mxu0 0.0
    %233 = vmatpush.msra.mxu0 0.0
    %234 = vmatpush.msra.mxu0 0.0
    %235 = vmatpush.msra.mxu0 0.0
    %236 = vmatpush.msra.mxu0 0.0
    %237 = vmatpush.msra.mxu0 0.0
    %238 = vmatpush.msra.mxu0 0.0
    %239 = vmatpush.msra.mxu0 0.0
    %240 = vmatpush.msra.mxu0 0.0
    %241 = vmatpush.msra.mxu0 0.0
    %242 = vmatpush.msra.mxu0 0.0
    %243 = vmatpush.msra.mxu0 0.0
    %244 = vmatpush.msra.mxu0 %v183
    %245 = vmatpush.msra.mxu0 %v175
    %246 = vmatpush.msra.mxu0 %v167
    %247 = vmatpush.msra.mxu0 %v159
    %248 = vmatmul.f32.gmra.mxu0 %v221
    %v249 = vpop.f32.mrf.mxu0
    %v250 = vadd.f32 %v202, %v249
    %251 = vmatmul.f32.gmra.mxu0 %v224
    %v252 = vpop.f32.mrf.mxu0
    %v253 = vadd.f32 %v207, %v252
    %254 = vmatmul.f32.gmra.mxu0 %v227
    %v255 = vpop.f32.mrf.mxu0
    %v256 = vadd.f32 %v212, %v255
    %257 = vmatmul.f32.gmra.mxu0 %v230
    %v258 = vpop.f32.mrf.mxu0
    %v259 = vadd.f32 %v217, %v258
    %260 = vdwg.mxu0
    %261 = vmatpush.msra.mxu0 0.0
    %262 = vmatpush.msra.mxu0 0.0
    %263 = vmatpush.msra.mxu0 0.0
    %264 = vmatpush.msra.mxu0 0.0
    %265 = vmatpush.msra.mxu0 0.0
    %266 = vmatpush.msra.mxu0 0.0
    %267 = vmatpush.msra.mxu0 0.0
    %268 = vmatpush.msra.mxu0 0.0
    %269 = vmatpush.msra.mxu0 0.0
    %270 = vmatpush.msra.mxu0 0.0
    %271 = vmatpush.msra.mxu0 0.0
    %272 = vmatpush.msra.mxu0 0.0
    %273 = vmatpush.msra.mxu0 %v184
    %274 = vmatpush.msra.mxu0 %v176
    %275 = vmatpush.msra.mxu0 %v168
    %276 = vmatpush.msra.mxu0 %v160
    %277 = vmatmul.f32.gmra.mxu0 %v221
    %v278 = vpop.f32.mrf.mxu0
    %v279 = vadd.f32 %v202, %v278
    %280 = vmatmul.f32.gmra.mxu0 %v224
    %v281 = vpop.f32.mrf.mxu0
    %v282 = vadd.f32 %v207, %v281
    %283 = vmatmul.f32.gmra.mxu0 %v227
    %v284 = vpop.f32.mrf.mxu0
    %v285 = vadd.f32 %v212, %v284
    %286 = vmatmul.f32.gmra.mxu0 %v230
    %v287 = vpop.f32.mrf.mxu0
    %v288 = vadd.f32 %v217, %v287
    %289 = vdwg.mxu0
    %290 = vmatpush.msra.mxu0 0.0
    %291 = vmatpush.msra.mxu0 0.0
    %292 = vmatpush.msra.mxu0 0.0
    %293 = vmatpush.msra.mxu0 0.0
    %294 = vmatpush.msra.mxu0 0.0
    %295 = vmatpush.msra.mxu0 0.0
    %296 = vmatpush.msra.mxu0 0.0
    %297 = vmatpush.msra.mxu0 0.0
    %298 = vmatpush.msra.mxu0 0.0
    %299 = vmatpush.msra.mxu0 0.0
    %300 = vmatpush.msra.mxu0 0.0
    %301 = vmatpush.msra.mxu0 0.0
    %302 = vmatpush.msra.mxu0 %v185
    %303 = vmatpush.msra.mxu0 %v177
    %304 = vmatpush.msra.mxu0 %v169
    %305 = vmatpush.msra.mxu0 %v161
    %306 = vmatmul.f32.gmra.mxu0 %v221
    %v307 = vpop.f32.mrf.mxu0
    %v308 = vadd.f32 %v202, %v307
    %309 = vmatmul.f32.gmra.mxu0 %v224
    %v310 = vpop.f32.mrf.mxu0
    %v311 = vadd.f32 %v207, %v310
    %312 = vmatmul.f32.gmra.mxu0 %v227
    %v313 = vpop.f32.mrf.mxu0
    %v314 = vadd.f32 %v212, %v313
    %315 = vmatmul.f32.gmra.mxu0 %v230
    %v316 = vpop.f32.mrf.mxu0
    %v317 = vadd.f32 %v217, %v316
    %318 = vdwg.mxu0
    %319 = vmatpush.msra.mxu0 0.0
    %320 = vmatpush.msra.mxu0 0.0
    %321 = vmatpush.msra.mxu0 0.0
    %322 = vmatpush.msra.mxu0 0.0
    %323 = vmatpush.msra.mxu0 0.0
    %324 = vmatpush.msra.mxu0 0.0
    %325 = vmatpush.msra.mxu0 0.0
    %326 = vmatpush.msra.mxu0 0.0
    %327 = vmatpush.msra.mxu0 0.0
    %328 = vmatpush.msra.mxu0 0.0
    %329 = vmatpush.msra.mxu0 0.0
    %330 = vmatpush.msra.mxu0 0.0
    %331 = vmatpush.msra.mxu0 %v186
    %332 = vmatpush.msra.mxu0 %v178
    %333 = vmatpush.msra.mxu0 %v170
    %334 = vmatpush.msra.mxu0 %v162
    %335 = vmatmul.f32.gmra.mxu0 %v221
    %v336 = vpop.f32.mrf.mxu0
    %v337 = vadd.f32 %v202, %v336
    %338 = vmatmul.f32.gmra.mxu0 %v224
    %v339 = vpop.f32.mrf.mxu0
    %v340 = vadd.f32 %v207, %v339
    %341 = vmatmul.f32.gmra.mxu0 %v227
    %v342 = vpop.f32.mrf.mxu0
    %v343 = vadd.f32 %v212, %v342
    %344 = vmatmul.f32.gmra.mxu0 %v230
    %v345 = vpop.f32.mrf.mxu0
    %v346 = vadd.f32 %v217, %v345
    %347 = vdwg.mxu0
    %348 = vmatpush.msra.mxu0 0.0
    %349 = vmatpush.msra.mxu0 0.0
    %350 = vmatpush.msra.mxu0 0.0
    %351 = vmatpush.msra.mxu0 0.0
    %352 = vmatpush.msra.mxu0 0.0
    %353 = vmatpush.msra.mxu0 0.0
    %354 = vmatpush.msra.mxu0 0.0
    %355 = vmatpush.msra.mxu0 0.0
    %356 = vmatpush.msra.mxu0 0.0
    %357 = vmatpush.msra.mxu0 0.0
    %358 = vmatpush.msra.mxu0 0.0
    %359 = vmatpush.msra.mxu0 0.0
    %360 = vmatpush.msra.mxu0 %v187
    %361 = vmatpush.msra.mxu0 %v179
    %362 = vmatpush.msra.mxu0 %v171
    %363 = vmatpush.msra.mxu0 %v163
    %364 = vmatmul.f32.gmra.mxu0 %v221
    %v365 = vpop.f32.mrf.mxu0
    %v366 = vadd.f32 %v202, %v365
    %367 = vmatmul.f32.gmra.mxu0 %v224
    %v368 = vpop.f32.mrf.mxu0
    %v369 = vadd.f32 %v207, %v368
    %370 = vmatmul.f32.gmra.mxu0 %v227
    %v371 = vpop.f32.mrf.mxu0
    %v372 = vadd.f32 %v212, %v371
    %373 = vmatmul.f32.gmra.mxu0 %v230
    %v374 = vpop.f32.mrf.mxu0
    %v375 = vadd.f32 %v217, %v374
    %376 = vdwg.mxu0
    %377 = vmatpush.msra.mxu0 0.0
    %378 = vmatpush.msra.mxu0 0.0
    %379 = vmatpush.msra.mxu0 0.0
    %380 = vmatpush.msra.mxu0 0.0
    %381 = vmatpush.msra.mxu0 0.0
    %382 = vmatpush.msra.mxu0 0.0
    %383 = vmatpush.msra.mxu0 0.0
    %384 = vmatpush.msra.mxu0 0.0
    %385 = vmatpush.msra.mxu0 0.0
    %386 = vmatpush.msra.mxu0 0.0
    %387 = vmatpush.msra.mxu0 0.0
    %388 = vmatpush.msra.mxu0 0.0
    %389 = vmatpush.msra.mxu0 %v188
    %390 = vmatpush.msra.mxu0 %v180
    %391 = vmatpush.msra.mxu0 %v172
    %392 = vmatpush.msra.mxu0 %v164
    %393 = vmatmul.f32.gmra.mxu0 %v221
    %v394 = vpop.f32.mrf.mxu0
    %v395 = vadd.f32 %v202, %v394
    %396 = vmatmul.f32.gmra.mxu0 %v224
    %v397 = vpop.f32.mrf.mxu0
    %v398 = vadd.f32 %v207, %v397
    %399 = vmatmul.f32.gmra.mxu0 %v227
    %v400 = vpop.f32.mrf.mxu0
    %v401 = vadd.f32 %v212, %v400
    %402 = vmatmul.f32.gmra.mxu0 %v230
    %v403 = vpop.f32.mrf.mxu0
    %v404 = vadd.f32 %v217, %v403
    %405 = vdwg.mxu0
    %406 = vmatpush.msra.mxu0 0.0
    %407 = vmatpush.msra.mxu0 0.0
    %408 = vmatpush.msra.mxu0 0.0
    %409 = vmatpush.msra.mxu0 0.0
    %410 = vmatpush.msra.mxu0 0.0
    %411 = vmatpush.msra.mxu0 0.0
    %412 = vmatpush.msra.mxu0 0.0
    %413 = vmatpush.msra.mxu0 0.0
    %414 = vmatpush.msra.mxu0 0.0
    %415 = vmatpush.msra.mxu0 0.0
    %416 = vmatpush.msra.mxu0 0.0
    %417 = vmatpush.msra.mxu0 0.0
    %418 = vmatpush.msra.mxu0 %v189
    %419 = vmatpush.msra.mxu0 %v181
    %420 = vmatpush.msra.mxu0 %v173
    %421 = vmatpush.msra.mxu0 %v165
    %422 = vmatmul.f32.gmra.mxu0 %v221
    %v423 = vpop.f32.mrf.mxu0
    %v424 = vadd.f32 %v202, %v423
    %425 = vmatmul.f32.gmra.mxu0 %v224
    %v426 = vpop.f32.mrf.mxu0
    %v427 = vadd.f32 %v207, %v426
    %428 = vmatmul.f32.gmra.mxu0 %v227
    %v429 = vpop.f32.mrf.mxu0
    %v430 = vadd.f32 %v212, %v429
    %431 = vmatmul.f32.gmra.mxu0 %v230
    %v432 = vpop.f32.mrf.mxu0
    %v433 = vadd.f32 %v217, %v432
    %434 = vdwg.mxu0
    %435 = vmatpush.msra.mxu0 0.0
    %436 = vmatpush.msra.mxu0 0.0
    %437 = vmatpush.msra.mxu0 0.0
    %438 = vmatpush.msra.mxu0 0.0
    %439 = vmatpush.msra.mxu0 0.0
    %440 = vmatpush.msra.mxu0 0.0
    %441 = vmatpush.msra.mxu0 0.0
    %442 = vmatpush.msra.mxu0 0.0
    %443 = vmatpush.msra.mxu0 0.0
    %444 = vmatpush.msra.mxu0 0.0
    %445 = vmatpush.msra.mxu0 0.0
    %446 = vmatpush.msra.mxu0 0.0
    %447 = vmatpush.msra.mxu0 %v190
    %448 = vmatpush.msra.mxu0 %v182
    %449 = vmatpush.msra.mxu0 %v174
    %450 = vmatpush.msra.mxu0 %v166
    %451 = vmatmul.f32.gmra.mxu0 %v221
    %v452 = vpop.f32.mrf.mxu0
    %v453 = vadd.f32 %v202, %v452
    %454 = vmatmul.f32.gmra.mxu0 %v224
    %v455 = vpop.f32.mrf.mxu0
    %v456 = vadd.f32 %v207, %v455
    %457 = vmatmul.f32.gmra.mxu0 %v227
    %v458 = vpop.f32.mrf.mxu0
    %v459 = vadd.f32 %v212, %v458
    %460 = vmatmul.f32.gmra.mxu0 %v230
    %v461 = vpop.f32.mrf.mxu0
    %v462 = vadd.f32 %v217, %v461
    %463 = vdwg.mxu0
    %v464 = vmax.f32 %v250, 0.0
    %v465 = vmax.f32 %v279, 0.0
    %v466 = vmax.f32 %v308, 0.0
    %v467 = vmax.f32 %v337, 0.0
    %v468 = vmax.f32 %v366, 0.0
    %v469 = vmax.f32 %v395, 0.0
    %v470 = vmax.f32 %v424, 0.0
    %v471 = vmax.f32 %v453, 0.0
    %v472 = vmax.f32 %v253, 0.0
    %v473 = vmax.f32 %v282, 0.0
    %v474 = vmax.f32 %v311, 0.0
    %v475 = vmax.f32 %v340, 0.0
    %v476 = vmax.f32 %v369, 0.0
    %v477 = vmax.f32 %v398, 0.0
    %v478 = vmax.f32 %v427, 0.0
    %v479 = vmax.f32 %v456, 0.0
    %v480 = vmax.f32 %v256, 0.0
    %v481 = vmax.f32 %v285, 0.0
    %v482 = vmax.f32 %v314, 0.0
    %v483 = vmax.f32 %v343, 0.0
    %v484 = vmax.f32 %v372, 0.0
    %v485 = vmax.f32 %v401, 0.0
    %v486 = vmax.f32 %v430, 0.0
    %v487 = vmax.f32 %v459, 0.0
    %v488 = vmax.f32 %v259, 0.0
    %v489 = vmax.f32 %v288, 0.0
    %v490 = vmax.f32 %v317, 0.0
    %v491 = vmax.f32 %v346, 0.0
    %v492 = vmax.f32 %v375, 0.0
    %v493 = vmax.f32 %v404, 0.0
    %v494 = vmax.f32 %v433, 0.0
    %v495 = vmax.f32 %v462, 0.0
    %v496 = vld [vmem:[%s5] sm:$0xff]
    %v497 = vld [vmem:[%s5 + $0x8] sm:$0xff]
    %v498 = vld [vmem:[%s5 + $0x10] sm:$0xff]
    %v499 = vld [vmem:[%s5 + $0x18] sm:$0xff]
    %501 = vset.pattern.permute.xlu0 0
    %502 = vperm.xlu0 %501, %v496
    %v503 = vpop.permute.xlu0 %502
    %506 = vset.pattern.permute.xlu0 0
    %507 = vperm.xlu0 %506, %v497
    %v508 = vpop.permute.xlu0 %507
    %511 = vset.pattern.permute.xlu0 0
    %512 = vperm.xlu0 %511, %v498
    %v513 = vpop.permute.xlu0 %512
    %516 = vset.pattern.permute.xlu0 0
    %517 = vperm.xlu0 %516, %v499
    %v518 = vpop.permute.xlu0 %517
    %v520 = vmul.f32 %v503, %v464
    %v521 = vmul.f32 %v503, %v465
    %v522 = vmul.f32 %v503, %v466
    %v523 = vmul.f32 %v503, %v467
    %v524 = vmul.f32 %v503, %v468
    %v525 = vmul.f32 %v503, %v469
    %v526 = vmul.f32 %v503, %v470
    %v527 = vmul.f32 %v503, %v471
    %v528 = vmul.f32 %v508, %v472
    %v529 = vmul.f32 %v508, %v473
    %v530 = vmul.f32 %v508, %v474
    %v531 = vmul.f32 %v508, %v475
    %v532 = vmul.f32 %v508, %v476
    %v533 = vmul.f32 %v508, %v477
    %v534 = vmul.f32 %v508, %v478
    %v535 = vmul.f32 %v508, %v479
    %v536 = vmul.f32 %v513, %v480
    %v537 = vmul.f32 %v513, %v481
    %v538 = vmul.f32 %v513, %v482
    %v539 = vmul.f32 %v513, %v483
    %v540 = vmul.f32 %v513, %v484
    %v541 = vmul.f32 %v513, %v485
    %v542 = vmul.f32 %v513, %v486
    %v543 = vmul.f32 %v513, %v487
    %v544 = vmul.f32 %v518, %v488
    %v545 = vmul.f32 %v518, %v489
    %v546 = vmul.f32 %v518, %v490
    %v547 = vmul.f32 %v518, %v491
    %v548 = vmul.f32 %v518, %v492
    %v549 = vmul.f32 %v518, %v493
    %v550 = vmul.f32 %v518, %v494
    %v551 = vmul.f32 %v518, %v495
    %v552 = vadd.f32 %v520, %v528
    %v553 = vadd.f32 %v552, %v536
    %v554 = vadd.f32 %v553, %v544
    %v555 = vrot.slane %v554, 4
    %v556 = vadd.f32 %v554, %v555
    %v557 = vrot.slane %v556, 2
    %v558 = vadd.f32 %v556, %v557
    %v559 = vrot.slane %v558, 1
    %v560 = vadd.f32 %v558, %v559
    %v561 = vadd.f32 %v521, %v529
    %v562 = vadd.f32 %v561, %v537
    %v563 = vadd.f32 %v562, %v545
    %v564 = vrot.slane %v563, 4
    %v565 = vadd.f32 %v563, %v564
    %v566 = vrot.slane %v565, 2
    %v567 = vadd.f32 %v565, %v566
    %v568 = vrot.slane %v567, 1
    %v569 = vadd.f32 %v567, %v568
    %v570 = vadd.f32 %v522, %v530
    %v571 = vadd.f32 %v570, %v538
    %v572 = vadd.f32 %v571, %v546
    %v573 = vrot.slane %v572, 4
    %v574 = vadd.f32 %v572, %v573
    %v575 = vrot.slane %v574, 2
    %v576 = vadd.f32 %v574, %v575
    %v577 = vrot.slane %v576, 1
    %v578 = vadd.f32 %v576, %v577
    %v579 = vadd.f32 %v523, %v531
    %v580 = vadd.f32 %v579, %v539
    %v581 = vadd.f32 %v580, %v547
    %v582 = vrot.slane %v581, 4
    %v583 = vadd.f32 %v581, %v582
    %v584 = vrot.slane %v583, 2
    %v585 = vadd.f32 %v583, %v584
    %v586 = vrot.slane %v585, 1
    %v587 = vadd.f32 %v585, %v586
    %v588 = vadd.f32 %v524, %v532
    %v589 = vadd.f32 %v588, %v540
    %v590 = vadd.f32 %v589, %v548
    %v591 = vrot.slane %v590, 4
    %v592 = vadd.f32 %v590, %v591
    %v593 = vrot.slane %v592, 2
    %v594 = vadd.f32 %v592, %v593
    %v595 = vrot.slane %v594, 1
    %v596 = vadd.f32 %v594, %v595
    %v597 = vadd.f32 %v525, %v533
    %v598 = vadd.f32 %v597, %v541
    %v599 = vadd.f32 %v598, %v549
    %v600 = vrot.slane %v599, 4
    %v601 = vadd.f32 %v599, %v600
    %v602 = vrot.slane %v601, 2
    %v603 = vadd.f32 %v601, %v602
    %v604 = vrot.slane %v603, 1
    %v605 = vadd.f32 %v603, %v604
    %v606 = vadd.f32 %v526, %v534
    %v607 = vadd.f32 %v606, %v542
    %v608 = vadd.f32 %v607, %v550
    %v609 = vrot.slane %v608, 4
    %v610 = vadd.f32 %v608, %v609
    %v611 = vrot.slane %v610, 2
    %v612 = vadd.f32 %v610, %v611
    %v613 = vrot.slane %v612, 1
    %v614 = vadd.f32 %v612, %v613
    %v615 = vadd.f32 %v527, %v535
    %v616 = vadd.f32 %v615, %v543
    %v617 = vadd.f32 %v616, %v551
    %v618 = vrot.slane %v617, 4
    %v619 = vadd.f32 %v617, %v618
    %v620 = vrot.slane %v619, 2
    %v621 = vadd.f32 %v619, %v620
    %v622 = vrot.slane %v621, 1
    %v623 = vadd.f32 %v621, %v622
    %v624 = vld [vmem:[#allocation2] sm:$0x1]
    %626 = vset.pattern.permute.xlu0 0
    %627 = vperm.xlu0 %626, %v624
    %v628 = vpop.permute.xlu0 %627
    %v630 = vperm.slane %v628, 0
    %v631 = vadd.f32 %v560, %v630
    %v632 = vadd.f32 %v569, %v630
    %v633 = vadd.f32 %v578, %v630
    %v634 = vadd.f32 %v587, %v630
    %v635 = vadd.f32 %v596, %v630
    %v636 = vadd.f32 %v605, %v630
    %v637 = vadd.f32 %v614, %v630
    %v638 = vadd.f32 %v623, %v630
    %v647 = vrot.slane %v632, 7
    %v648 = vrot.slane %v633, 6
    %v649 = vrot.slane %v634, 5
    %v650 = vrot.slane %v635, 4
    %v651 = vrot.slane %v636, 3
    %v652 = vrot.slane %v637, 2
    %v653 = vrot.slane %v638, 1
    %vm654 = vcmask 1040384
    %v655 = vsel %vm654, %v631, %v647
    %vm656 = vcmask 1042434
    %v657 = vsel %vm656, %v648, %v649
    %vm658 = vcmask 1041408
    %v659 = vsel %vm658, %v655, %v657
    %vm660 = vcmask 1044484
    %v661 = vsel %vm660, %v650, %v651
    %vm662 = vcmask 1046534
    %v663 = vsel %vm662, %v652, %v653
    %vm664 = vcmask 1045508
    %v665 = vsel %vm664, %v661, %v663
    %vm666 = vcmask 1043456
    %v667 = vsel %vm666, %v659, %v665
    %669 = vst [vmem:[#allocation3] sm:$0xff] %v667
    // Predicated region
    $region30: #{value_layer_forward.1} parent=1 // pred_check
      _
    $region31: #{value_layer_forward.1} parent=1 // pred_check_branch
      %671 = sbr.rel (0) target = $region33
    $region32: #{value_layer_forward.1} parent=1 // pred_region
      %673 = vsyncadd [#allocation4], 0
      %s675 = sshll.u32 [#allocation3], 4
      %s676 = int_to_ptr.vmem [resolvable:$true] %s675
      %s677 = sshll.u32 %s7, 4
      %s678 = int_to_ptr.hbm [resolvable:$true] %s677
      %680 = dma.vmem_to_hbm [thread:$0]  %s676, 128, %s678, [#allocation4]
    $region33: #{value_layer_forward.1} parent=1 // pred_fallthru
      _
    // Predicated region
    $region34: #{value_layer_forward.1} parent=1 // pred_check
      _
    $region35: #{value_layer_forward.1} parent=1 // pred_check_branch
      %682 = sbr.rel (0) target = $region37
    $region36: #{value_layer_forward.1} parent=1 // pred_region
      %684 = dma.done [#allocation4], 128
    $region37: #{value_layer_forward.1} parent=1 // pred_fallthru
      _
    %685 = vsyncpa [#allocation4], 1

</llo_original>
